<compile_context>
chip_gen: v6e
topology: v6e:2x2x1
jax: 0.10.0
libtpu: 0.0.40
codegen_flags: <defaults>
</compile_context>

<pallas_src>
import functools

import jax
import jax.numpy as jnp
from jax.experimental import pallas as pl
from jax.experimental.pallas import tpu as pltpu

IN_FEATURES = 11
HIDDEN = 256
OUT_FEATURES = 1


def mlp_kernel(x_ref, w1_ref, b1_ref, w2_ref, b2_ref, o_ref):
    # x_ref: (TB, 11)   w1_ref: (11, 256)   b1_ref: (1, 256)
    # w2_ref: (1, 256)  b2_ref: (1, 1) in SMEM   o_ref: (TB, 1)
    x = x_ref[...]
    # hidden = relu(x @ W1 + b1)   -- MXU matmul, f32 accumulation
    h = jnp.dot(x, w1_ref[...], preferred_element_type=jnp.float32)
    h = jnp.maximum(h + b1_ref[...], 0.0)
    # output layer has N=1: an MXU matmul would use 1 of 256 output columns and
    # still pay full push/pop latency, so do VPU multiply + lane reduction.
    out = jnp.sum(h * w2_ref[...], axis=-1, keepdims=True) + b2_ref[0, 0]
    o_ref[...] = out.astype(o_ref.dtype)


def _round_up(n, m):
    return ((n + m - 1) // m) * m


@functools.partial(jax.jit, static_argnames=("block_b",))
def sub_model_forward(x, w1, b1, w2, b2, *, block_b=1024):
    """x: (B, 11) f32, w1: (11, 256), b1: (1, 256), w2: (1, 256), b2: (1, 1).

    Returns (B, 1) f32. Batch is padded to a multiple of the tile size and the
    padding is sliced off after the call.
    """
    B = x.shape[0]
    tb = min(block_b, _round_up(B, 8))           # tile rows (multiple of 8)
    b_pad = _round_up(B, tb)
    if b_pad != B:
        x = jnp.pad(x, ((0, b_pad - B), (0, 0)))
    grid = (b_pad // tb,)

    flops = 2 * b_pad * IN_FEATURES * HIDDEN + 3 * b_pad * HIDDEN
    bytes_accessed = (
        b_pad * (IN_FEATURES + OUT_FEATURES) * 4
        + (IN_FEATURES * HIDDEN + 2 * HIDDEN + 1) * 4
    )

    out = pl.pallas_call(
        mlp_kernel,
        out_shape=jax.ShapeDtypeStruct((b_pad, OUT_FEATURES), jnp.float32),
        grid=grid,
        in_specs=[
            pl.BlockSpec((tb, IN_FEATURES), lambda i: (i, 0)),       # x tile
            pl.BlockSpec((IN_FEATURES, HIDDEN), lambda i: (0, 0)),   # W1 (resident)
            pl.BlockSpec((1, HIDDEN), lambda i: (0, 0)),             # b1 (resident)
            pl.BlockSpec((1, HIDDEN), lambda i: (0, 0)),             # W2 row (resident)
            pl.BlockSpec(memory_space=pltpu.SMEM),                   # b2 scalar
        ],
        out_specs=pl.BlockSpec((tb, OUT_FEATURES), lambda i: (i, 0)),
        compiler_params=pltpu.CompilerParams(
            dimension_semantics=("parallel",),
        ),
        cost_estimate=pl.CostEstimate(
            flops=flops, transcendentals=0, bytes_accessed=bytes_accessed),
    )(x, w1, b1, w2, b2)
    return out[:B]


def init_params(key):
    """Deterministic init mimicking nn.Linear default uniform(-1/sqrt(fan_in), +)."""
    k1, k2, k3, k4 = jax.random.split(key, 4)
    bound1 = 1.0 / jnp.sqrt(IN_FEATURES)
    bound2 = 1.0 / jnp.sqrt(HIDDEN)
    # W1 stored as (in, out) so the kernel does x @ W1 directly.
    w1 = jax.random.uniform(k1, (IN_FEATURES, HIDDEN), jnp.float32, -bound1, bound1)
    b1 = jax.random.uniform(k2, (1, HIDDEN), jnp.float32, -bound1, bound1)
    # W2 stored as a (1, 256) row (PyTorch-native (out, in) layout) for the
    # VPU-mul + lane-reduce second layer.
    w2 = jax.random.uniform(k3, (1, HIDDEN), jnp.float32, -bound2, bound2)
    b2 = jax.random.uniform(k4, (1, OUT_FEATURES), jnp.float32, -bound2, bound2)
    return w1, b1, w2, b2


if __name__ == "__main__":
    key = jax.random.PRNGKey(0)
    kx, kp = jax.random.split(key)

    B = 8
    x = jax.random.normal(kx, (B, IN_FEATURES), jnp.float32)
    w1, b1, w2, b2 = init_params(kp)

    out = jax.block_until_ready(sub_model_forward(x, w1, b1, w2, b2))

    # Reference in plain JAX (same math as the PyTorch module).
    ref = jnp.maximum(x @ w1 + b1, 0.0) @ w2.T + b2[0, 0]
    assert out.shape == (B, OUT_FEATURES)
    assert jnp.allclose(out, ref, atol=1e-5), "mismatch vs reference"

    print("KERNEL_OK")
</pallas_src>

<mosaic_0001>
module attributes {stable_mosaic.version = 11 : i64} {
  func.func @mlp_kernel(%arg0: i32, %arg1: memref<8x11xf32, #tpu.memory_space<vmem>>, %arg2: memref<11x256xf32, #tpu.memory_space<vmem>>, %arg3: memref<1x256xf32, #tpu.memory_space<vmem>>, %arg4: memref<1x256xf32, #tpu.memory_space<vmem>>, %arg5: memref<1x1xf32, #tpu.memory_space<smem>>, %arg6: memref<8x1xf32, #tpu.memory_space<vmem>>) attributes {dimension_semantics = [#tpu.dimension_semantics<parallel>], iteration_bounds = array<i64: 1>, scalar_prefetch = 0 : i64, scratch_operands = 0 : i64, tpu.core_type = #tpu.core_type<tc>, window_params = [{transform_indices = @transform_0, window_bounds = array<i64: 8, 11>}, {pipeline_mode = #tpu.pipeline_mode<synchronous>, transform_indices = @transform_1, window_bounds = array<i64: 11, 256>}, {pipeline_mode = #tpu.pipeline_mode<synchronous>, transform_indices = @transform_2, window_bounds = array<i64: 1, 256>}, {pipeline_mode = #tpu.pipeline_mode<synchronous>, transform_indices = @transform_3, window_bounds = array<i64: 1, 256>}, {transform_indices = @transform_4, window_bounds = array<i64: 1, 1>}, {transform_indices = @transform_5, window_bounds = array<i64: 8, 1>}]} {
    %c0 = arith.constant 0 : index
    %c0_0 = arith.constant 0 : index
    %0 = vector.load %arg1[%c0, %c0_0] : memref<8x11xf32, #tpu.memory_space<vmem>>, vector<8x11xf32>
    %c0_1 = arith.constant 0 : index
    %c0_2 = arith.constant 0 : index
    %1 = vector.load %arg2[%c0_1, %c0_2] : memref<11x256xf32, #tpu.memory_space<vmem>>, vector<11x256xf32>
    %cst = arith.constant dense<0.000000e+00> : vector<8x256xf32>
    %2 = tpu.matmul %0, %1, %cst {dimension_numbers = #tpu.dot_dimension_numbers<[1], [0], [0], [1], [0, 0, 1, 1], [], []>} : vector<8x11xf32>, vector<11x256xf32>, vector<8x256xf32> -> vector<8x256xf32>
    %c0_3 = arith.constant 0 : index
    %c0_4 = arith.constant 0 : index
    %3 = vector.load %arg3[%c0_3, %c0_4] : memref<1x256xf32, #tpu.memory_space<vmem>>, vector<1x256xf32>
    %4 = vector.broadcast %3 : vector<1x256xf32> to vector<8x256xf32>
    %5 = arith.addf %2, %4 : vector<8x256xf32>
    %cst_5 = arith.constant 0.000000e+00 : f32
    %6 = vector.broadcast %cst_5 : f32 to vector<8x256xf32>
    %7 = arith.maximumf %5, %6 : vector<8x256xf32>
    %c0_6 = arith.constant 0 : index
    %c0_7 = arith.constant 0 : index
    %8 = vector.load %arg4[%c0_6, %c0_7] : memref<1x256xf32, #tpu.memory_space<vmem>>, vector<1x256xf32>
    %9 = vector.broadcast %8 : vector<1x256xf32> to vector<8x256xf32>
    %10 = arith.mulf %7, %9 : vector<8x256xf32>
    %cst_8 = arith.constant dense<0.000000e+00> : vector<8xf32>
    %11 = vector.multi_reduction <add>, %10, %cst_8 [1] : vector<8x256xf32> to vector<8xf32>
    %12 = vector.shape_cast %11 : vector<8xf32> to vector<8x1xf32>
    %c0_9 = arith.constant 0 : index
    %c0_10 = arith.constant 0 : index
    %13 = memref.load %arg5[%c0_9, %c0_10] : memref<1x1xf32, #tpu.memory_space<smem>>
    %14 = vector.broadcast %13 : f32 to vector<8x1xf32>
    %15 = arith.addf %12, %14 : vector<8x1xf32>
    %c0_11 = arith.constant 0 : index
    %c0_12 = arith.constant 0 : index
    %16 = vector.load %arg6[%c0_11, %c0_12] : memref<8x1xf32, #tpu.memory_space<vmem>>, vector<8x1xf32>
    tpu.vector_store %arg6[%c0_11, %c0_12], %15 {strides = array<i32>} : memref<8x1xf32, #tpu.memory_space<vmem>>, vector<8x1xf32>,
    return
  }
  func.func @transform_0(%arg0: i32) -> (i32, i32) {
    %c0_i32 = arith.constant 0 : i32
    %c0_i32_0 = arith.constant 0 : i32
    return %arg0, %c0_i32 : i32, i32
  }
  func.func @transform_1(%arg0: i32) -> (i32, i32) {
    %c0_i32 = arith.constant 0 : i32
    %c0_i32_0 = arith.constant 0 : i32
    %c0_i32_1 = arith.constant 0 : i32
    return %c0_i32, %c0_i32_0 : i32, i32
  }
  func.func @transform_2(%arg0: i32) -> (i32, i32) {
    %c0_i32 = arith.constant 0 : i32
    %c0_i32_0 = arith.constant 0 : i32
    %c0_i32_1 = arith.constant 0 : i32
    return %c0_i32, %c0_i32_0 : i32, i32
  }
  func.func @transform_3(%arg0: i32) -> (i32, i32) {
    %c0_i32 = arith.constant 0 : i32
    %c0_i32_0 = arith.constant 0 : i32
    %c0_i32_1 = arith.constant 0 : i32
    return %c0_i32, %c0_i32_0 : i32, i32
  }
  func.func @transform_4(%arg0: i32) -> (i32, i32) {
    %c0_i32 = arith.constant 0 : i32
    %c0_i32_0 = arith.constant 0 : i32
    %c0_i32_1 = arith.constant 0 : i32
    return %c0_i32, %c0_i32_0 : i32, i32
  }
  func.func @transform_5(%arg0: i32) -> (i32, i32) {
    %c0_i32 = arith.constant 0 : i32
    %c0_i32_0 = arith.constant 0 : i32
    return %arg0, %c0_i32 : i32, i32
  }
}

</mosaic_0001>

<llo_original>
// kernel: sub_model_forward.1
$region0: #{sub_model_forward.1}
  #allocation0 [shape = 'u32[]', space=smem, size = 0x4, offset = 0x4, fixed_abs, tag = 'smem constant byte address 0x4 - core index']
  #allocation1 [shape = 'u32[144,128]{1,0:T(1,128)}', space=vmem, size = 0x12000, scoped, tag = 'internal scratch']
  #allocation2 [shape = 'f32[1,1]{1,0:T(1,128)S(6)}', space=smem, size = 0x200, scoped, tag = 'scoped memory for sub_model_forward.1']
  %s0 = inlined_call_operand.hbm [shape: f32[8,11], index: 0, kind: input, shape index: {}]
  %s1 = inlined_call_operand.hbm [shape: f32[11,256], index: 1, kind: input, shape index: {}]
  %s2 = inlined_call_operand.vmem [shape: f32[1,256], index: 2, kind: input, shape index: {}]
  %s3 = inlined_call_operand.vmem [shape: f32[1,256], index: 3, kind: input, shape index: {}]
  %s4 = inlined_call_operand.<no memory space> [shape: f32[1,1], index: 4, kind: input, shape index: {}]
  %s5 = inlined_call_operand.vmem [shape: f32[8,1], index: 5, kind: output, shape index: {}]
  %s6 = sld [smem:[#allocation0]]
  $region38: #{sub_model_forward.1} parent=0
    _
  %s8 = ssub.s32 1, %s6
  %s9 = scalar_select 0, %s8, %s6
  %10 = sst [smem:[#allocation2]] %s4
  $region1: #{sub_model_forward.1} parent=0
    #allocation3 [shape = 'u8[4096]{0}', space=vmem, size = 0x1000, scoped, tag = 'input window, operand 0, single buffered']
    #allocation4 [shape = 's32[1]{0}', space=sflag, size = 0x4, scoped, tag = 'scoped memory for sub_model_forward.1']
    #allocation5 [shape = 'u8[16384]{0}', space=vmem, size = 0x4000, scoped, tag = 'input window, operand 1, single buffered']
    #allocation6 [shape = 's32[1]{0}', space=sflag, size = 0x4, scoped, tag = 'scoped memory for sub_model_forward.1']
    %11 = vsyncpa [#allocation4], 0
    %12 = vsyncpa [#allocation6], 0
    // Predicated region
    $region2: #{sub_model_forward.1} parent=1 // pred_check
      _
    $region3: #{sub_model_forward.1} parent=1 // pred_check_branch
      %14 = sbr.rel (0) target = $region5
    $region4: #{sub_model_forward.1} parent=1 // pred_region
      %s16 = ssub.s32 128, 128
      %17 = vsyncadd [#allocation4], %s16
      %s19 = sshll.u32 [#allocation3], 4
      %s20 = int_to_ptr.vmem [resolvable:$true] %s19
      %22 = dma.hbm_to_vmem [thread:$0]  %s0, 128, %s20, [#allocation4]
    $region5: #{sub_model_forward.1} parent=1 // pred_fallthru
      _
    // Predicated region
    $region6: #{sub_model_forward.1} parent=1 // pred_check
      _
    $region7: #{sub_model_forward.1} parent=1 // pred_check_branch
      %24 = sbr.rel (0) target = $region9
    $region8: #{sub_model_forward.1} parent=1 // pred_region
      %s26 = ssub.s32 512, 512
      %27 = vsyncadd [#allocation6], %s26
      %s28 = sshll.u32 [#allocation5], 4
      %s29 = int_to_ptr.vmem [resolvable:$true] %s28
      %34 = dma.hbm_to_vmem [thread:$0]  %s1, 512, %s29, [#allocation6], 256, 256, 16
    $region9: #{sub_model_forward.1} parent=1 // pred_fallthru
      _
    // Predicated region
    $region10: #{sub_model_forward.1} parent=1 // pred_check
      _
    $region11: #{sub_model_forward.1} parent=1 // pred_check_branch
      %36 = sbr.rel (0) target = $region13
    $region12: #{sub_model_forward.1} parent=1 // pred_region
      _
    $region13: #{sub_model_forward.1} parent=1 // pred_fallthru
      _
    // Predicated region
    $region14: #{sub_model_forward.1} parent=1 // pred_check
      _
    $region15: #{sub_model_forward.1} parent=1 // pred_check_branch
      %38 = sbr.rel (0) target = $region17
    $region16: #{sub_model_forward.1} parent=1 // pred_region
      _
    $region17: #{sub_model_forward.1} parent=1 // pred_fallthru
      _
    // Predicated region
    $region18: #{sub_model_forward.1} parent=1 // pred_check
      _
    $region19: #{sub_model_forward.1} parent=1 // pred_check_branch
      %40 = sbr.rel (0) target = $region21
    $region20: #{sub_model_forward.1} parent=1 // pred_region
      _
    $region21: #{sub_model_forward.1} parent=1 // pred_fallthru
      _
    // Predicated region
    $region22: #{sub_model_forward.1} parent=1 // pred_check
      _
    $region23: #{sub_model_forward.1} parent=1 // pred_check_branch
      %42 = sbr.rel (0) target = $region25
    $region24: #{sub_model_forward.1} parent=1 // pred_region
      %43 = dma.done [#allocation4], 128
    $region25: #{sub_model_forward.1} parent=1 // pred_fallthru
      _
    // Predicated region
    $region26: #{sub_model_forward.1} parent=1 // pred_check
      _
    $region27: #{sub_model_forward.1} parent=1 // pred_check_branch
      %45 = sbr.rel (0) target = $region29
    $region28: #{sub_model_forward.1} parent=1 // pred_region
      %46 = dma.done [#allocation6], 512
    $region29: #{sub_model_forward.1} parent=1 // pred_fallthru
      _
    %v47 = vld [vmem:[#allocation3] sm:$0xff]
    %v48 = vld [vmem:[#allocation5] sm:$0xff]
    %v49 = vld [vmem:[#allocation5 + $0x8] sm:$0xff]
    %v50 = vld [vmem:[#allocation5 + $0x10] sm:$0x7]
    %v51 = vld [vmem:[#allocation5 + $0x18] sm:$0x7]
    %v52 = vld [vmem:[%s2] sm:$0x3]
    %v54 = vlaneseq
    %v55 = vshrl.u32 %v54, 7
    %v56 = vsub.s32 0, %v55
    %v57 = vrot.slane %v52, %v56
    %v58 = vlaneseq
    %v59 = vshrl.u32 %v58, 7
    %v60 = vsub.s32 1, %v59
    %v61 = vrot.slane %v52, %v60
    %vm64 = vcmask 89088
    %v66 = vsel %vm64, %v47, 0
    %vm68 = vcmask 1042432
    %v70 = vsel %vm68, %v50, 0
    %v73 = vsel %vm68, %v51, 0
    %75 = vmatprep.subr.mxu0 0.0
    %76 = vmatpush1.msra.mxu0 0.0
    %77 = vmatprep.subr.mxu0 0.0
    %78 = vmatpush1.msra.mxu0 0.0
    %79 = vmatprep.subr.mxu0 0.0
    %80 = vmatpush1.msra.mxu0 0.0
    %81 = vmatprep.subr.mxu0 0.0
    %82 = vmatpush1.msra.mxu0 0.0
    %83 = vmatprep.subr.mxu0 0.0
    %84 = vmatpush1.msra.mxu0 0.0
    %85 = vmatprep.subr.mxu0 0.0
    %86 = vmatpush1.msra.mxu0 0.0
    %87 = vmatprep.subr.mxu0 0.0
    %88 = vmatpush1.msra.mxu0 0.0
    %89 = vmatprep.subr.mxu0 0.0
    %90 = vmatpush1.msra.mxu0 0.0
    %91 = vmatprep.subr.mxu0 0.0
    %92 = vmatpush1.msra.mxu0 0.0
    %93 = vmatprep.subr.mxu0 0.0
    %94 = vmatpush1.msra.mxu0 0.0
    %95 = vmatprep.subr.mxu0 0.0
    %96 = vmatpush1.msra.mxu0 0.0
    %97 = vmatprep.subr.mxu0 0.0
    %98 = vmatpush1.msra.mxu0 0.0
    %99 = vmatprep.subr.mxu0 0.0
    %100 = vmatpush1.msra.mxu0 0.0
    %101 = vmatprep.subr.mxu0 0.0
    %102 = vmatpush1.msra.mxu0 0.0
    %103 = vmatprep.subr.mxu0 %v73
    %104 = vmatpush1.msra.mxu0 %v70
    %105 = vmatprep.subr.mxu0 %v49
    %106 = vmatpush1.msra.mxu0 %v48
    %107 = vmatprep.subr.mxu0 0.0
    %108 = vmatpush2.msra.mxu0 0.0
    %109 = vmatprep.subr.mxu0 0.0
    %110 = vmatpush2.msra.mxu0 0.0
    %111 = vmatprep.subr.mxu0 0.0
    %112 = vmatpush2.msra.mxu0 0.0
    %113 = vmatprep.subr.mxu0 0.0
    %114 = vmatpush2.msra.mxu0 0.0
    %115 = vmatprep.subr.mxu0 0.0
    %116 = vmatpush2.msra.mxu0 0.0
    %117 = vmatprep.subr.mxu0 0.0
    %118 = vmatpush2.msra.mxu0 0.0
    %119 = vmatprep.subr.mxu0 0.0
    %120 = vmatpush2.msra.mxu0 0.0
    %121 = vmatprep.subr.mxu0 0.0
    %122 = vmatpush2.msra.mxu0 0.0
    %123 = vmatprep.subr.mxu0 0.0
    %124 = vmatpush2.msra.mxu0 0.0
    %125 = vmatprep.subr.mxu0 0.0
    %126 = vmatpush2.msra.mxu0 0.0
    %127 = vmatprep.subr.mxu0 0.0
    %128 = vmatpush2.msra.mxu0 0.0
    %129 = vmatprep.subr.mxu0 0.0
    %130 = vmatpush2.msra.mxu0 0.0
    %131 = vmatprep.subr.mxu0 0.0
    %132 = vmatpush2.msra.mxu0 0.0
    %133 = vmatprep.subr.mxu0 0.0
    %134 = vmatpush2.msra.mxu0 0.0
    %135 = vmatprep.subr.mxu0 0.0
    %136 = vmatpush2.msra.mxu0 0.0
    %137 = vmatprep.subr.mxu0 0.0
    %138 = vmatpush2.msra.mxu0 0.0
    %139 = vmatprep.mubr.f32.mxu0 0.0
    %140 = vmatmul.mubr.f32.gmra.mxu0 %v66
    %v141 = vpop.f32.mrf.mxu0
    %v142 = vadd.f32 %v57, %v141
    %v143 = vpop.f32.mrf.mxu0
    %v144 = vadd.f32 %v61, %v143
    %145 = vdwg.mxu0
    %v146 = vmax.f32 %v142, 0.0
    %v147 = vmax.f32 %v144, 0.0
    %v148 = vld [vmem:[%s3] sm:$0x3]
    %v150 = vlaneseq
    %v151 = vshrl.u32 %v150, 7
    %v152 = vsub.s32 0, %v151
    %v153 = vrot.slane %v148, %v152
    %v154 = vlaneseq
    %v155 = vshrl.u32 %v154, 7
    %v156 = vsub.s32 1, %v155
    %v157 = vrot.slane %v148, %v156
    %v160 = vmul.f32 %v146, %v153
    %v161 = vmul.f32 %v147, %v157
    %v162 = vadd.f32 %v160, %v161
    %163 = vadd.xlane.f32.xlu0 %v162
    %v164 = vpop.xlane.xlu0 %163
    %s165 = sld [smem:[#allocation2]]
    %v166 = vstv %s165
    %v167 = vadd.f32 %v164, %v166
    %vm168 = vcmask 7168
    %169 = vst.msk [vmem:[%s5] sm:$0xff] %vm168, %v167
    // Predicated region
    $region30: #{sub_model_forward.1} parent=1 // pred_check
      _
    $region31: #{sub_model_forward.1} parent=1 // pred_check_branch
      %171 = sbr.rel (0) target = $region33
    $region32: #{sub_model_forward.1} parent=1 // pred_region
      _
    $region33: #{sub_model_forward.1} parent=1 // pred_fallthru
      _
    // Predicated region
    $region34: #{sub_model_forward.1} parent=1 // pred_check
      _
    $region35: #{sub_model_forward.1} parent=1 // pred_check_branch
      %173 = sbr.rel (0) target = $region37
    $region36: #{sub_model_forward.1} parent=1 // pred_region
      _
    $region37: #{sub_model_forward.1} parent=1 // pred_fallthru
      _
    %174 = vsyncpa [#allocation4], 1
    %175 = vsyncpa [#allocation6], 1

</llo_original>
